<compile_context>
chip_gen: v6e
topology: v6e:2x2x1
jax: 0.10.0
libtpu: 0.0.40
codegen_flags: <defaults>
</compile_context>

<pallas_src>
import numpy as np
import jax
import jax.numpy as jnp
from jax.experimental import pallas as pl
from jax.experimental.pallas import tpu as pltpu

LEAKY_SLOPE = 0.01  # InPlaceABNSync default activation: leaky_relu(slope=0.01)
BN_EPS = 1e-5


def _round_up(a, b):
    return -(-a // b) * b


# ----------------------------------------------------------------------------
# Pallas kernel: fused bottleneck, single MXU contraction per tile
#   out = leaky_relu( W_full @ [U_aug ; x] )      (channels-first, HW on lanes)
# ----------------------------------------------------------------------------
def _psp_bottleneck_kernel(u_ref, x_ref, w_ref, o_ref, rhs_ref):
    # u_ref  : (SP, T)      bf16  stacked bilinear rows + ones (bias) row + zero pad
    # x_ref  : (1, C, T)    f32   original feats tile (cast to bf16 in-kernel)
    # w_ref  : (1, O, SP+C) bf16  per-image fused LHS = [Z[n] | b_eff | 0 | wx_eff]
    # o_ref  : (1, O, T)    out dtype
    # rhs_ref: (SP+C, T)    bf16  VMEM scratch holding the merged contraction RHS
    sp = u_ref.shape[0]
    c = x_ref.shape[1]
    rhs_ref[:sp, :] = u_ref[...]                              # aligned (sp % 16 == 0)
    rhs_ref[sp:sp + c, :] = x_ref[0].astype(rhs_ref.dtype)    # in-kernel bf16 cast of x
    acc = jnp.dot(w_ref[0], rhs_ref[...], preferred_element_type=jnp.float32)
    acc = jnp.where(acc >= 0.0, acc, LEAKY_SLOPE * acc)       # leaky_relu in f32
    o_ref[0] = acc.astype(o_ref.dtype)


# ----------------------------------------------------------------------------
# VMEM-budget-aware tiling
# ----------------------------------------------------------------------------
def _vmem_limit_bytes():
    cap = 64 << 20  # conservative default = v7x physical VMEM
    try:
        cap = int(getattr(pltpu.get_tpu_info(), "vmem_capacity_bytes", cap))
    except Exception:
        pass
    # leave headroom for compiler-internal scratch; 112 MiB max on 128 MiB parts
    return max(32 << 20, min(cap - (16 << 20), 112 << 20))


def _choose_hw_tiling(hw, n_batch, bytes_per_col, tile_budget):
    """Pick (hw_pad, T): lane-padded spatial extent and lane-tile size."""
    hw128 = _round_up(hw, 128)
    t_max = (tile_budget // max(bytes_per_col, 1)) // 128 * 128
    t_max = max(128, min(t_max, 4096))
    if hw128 <= t_max:
        hw_pad, t = hw128, hw128
    else:
        t = t_max
        while hw128 % t != 0:                 # largest 128-multiple divisor <= t_max
            t -= 128
        if t >= min(512, t_max):
            hw_pad = hw128
        else:
            # No bandwidth-efficient divisor (e.g. hw128 = 29*128): pad a few extra
            # lane columns instead of collapsing to T=128 (3x+ the grid steps).
            t = min(t_max, 1024)
            hw_pad = _round_up(hw, t)
    # Give the v7x megacore (2 TCs) at least two grid steps to shard.
    while n_batch * (hw_pad // t) < 2 and t % 256 == 0:
        t //= 2
    return hw_pad, t


def psp_bottleneck_fused(x_cm, w_full, u_aug, out_dtype=jnp.bfloat16):
    """out[n] = leaky_relu(w_full[n] @ concat([u_aug, x_cm[n]], axis=0)), f32 accum.

    x_cm  : (N, C, HW)    f32   original feats, channels-first, flattened spatial
    w_full: (N, O, SP+C)  bf16  per-image fused LHS
    u_aug : (SP, HW)      bf16  stacked upsample rows + ones bias row + zero pad rows
    """
    N, C, HW = x_cm.shape
    O = w_full.shape[1]
    SP = u_aug.shape[0]
    KP = SP + C
    assert w_full.shape == (N, O, KP)

    out_bytes = np.dtype(out_dtype).itemsize
    vmem_limit = _vmem_limit_bytes()
    # T-independent VMEM: double-buffered per-image weight block + slack.
    # TODO(synk): pipeline_mode=pl.Buffered(1) on the w block (constant across the
    # t axis) would reclaim one buffer for a larger T on v7x; left default for safety.
    fixed = 2 * O * KP * 2 + (2 << 20)
    tile_budget = int(vmem_limit * 0.85) - fixed
    # per-lane-column bytes: x (f32, 2 bufs) + u (bf16, 2 bufs) + out (2 bufs) + rhs scratch
    bytes_per_col = 2 * C * 4 + 2 * SP * 2 + 2 * O * out_bytes + KP * 2
    hw_pad, T = _choose_hw_tiling(HW, N, bytes_per_col, tile_budget)

    if hw_pad != HW:
        x_cm = jnp.pad(x_cm, ((0, 0), (0, 0), (0, hw_pad - HW)))
        u_aug = jnp.pad(u_aug, ((0, 0), (0, hw_pad - HW)))

    # TODO(synk): if C grows into the thousands, add a K (channel) grid axis with a
    # f32 VMEM accumulator + pl.when init/finalize instead of a fully resident x tile.
    out = pl.pallas_call(
        _psp_bottleneck_kernel,
        out_shape=jax.ShapeDtypeStruct((N, O, hw_pad), out_dtype),
        grid=(N, hw_pad // T),
        in_specs=[
            pl.BlockSpec((SP, T), lambda n, t: (0, t)),
            pl.BlockSpec((1, C, T), lambda n, t: (n, 0, t)),
            pl.BlockSpec((1, O, KP), lambda n, t: (n, 0, 0)),
        ],
        out_specs=pl.BlockSpec((1, O, T), lambda n, t: (n, 0, t)),
        scratch_shapes=[pltpu.VMEM((KP, T), jnp.bfloat16)],
        compiler_params=pltpu.CompilerParams(
            dimension_semantics=("parallel", "parallel"),
            vmem_limit_bytes=int(vmem_limit)),
    )(u_aug, x_cm, w_full)

    if hw_pad != HW:
        out = out[:, :, :HW]
    return out


# ----------------------------------------------------------------------------
# Exact PyTorch semantics helpers (tiny constant matrices, built on host)
# ----------------------------------------------------------------------------
def adaptive_avg_pool_matrix(in_size, out_size):
    """P (out_size, in_size) s.t. P @ v == AdaptiveAvgPool1d(v)."""
    P = np.zeros((out_size, in_size), np.float32)
    for i in range(out_size):
        start = (i * in_size) // out_size
        end = -(-((i + 1) * in_size) // out_size)  # ceil
        P[i, start:end] = 1.0 / (end - start)
    return P


def bilinear_upsample_matrix(in_size, out_size):
    """B (out_size, in_size): 1-D bilinear, align_corners=True."""
    B = np.zeros((out_size, in_size), np.float32)
    if in_size == 1:
        B[:, 0] = 1.0
    else:
        for j in range(out_size):
            src = j * (in_size - 1) / (out_size - 1) if out_size > 1 else 0.0
            lo = int(np.floor(src))
            hi = min(lo + 1, in_size - 1)
            frac = src - lo
            B[j, lo] += 1.0 - frac
            B[j, hi] += frac
    return B


def stacked_upsample_matrix(sizes, H, W):
    """U (sum(s^2), H*W): row p*s+q of stage block i holds Bh[h,p]*Bw[w,q]."""
    blocks = []
    for s in sizes:
        Bh = bilinear_upsample_matrix(s, H)      # (H, s)
        Bw = bilinear_upsample_matrix(s, W)      # (W, s)
        blocks.append(np.kron(Bh.T, Bw.T))       # (s*s, H*W)
    return np.concatenate(blocks, axis=0).astype(np.float32)


# ----------------------------------------------------------------------------
# Deterministic parameter init (shapes follow PSPModuleV2.__init__)
# ----------------------------------------------------------------------------
def init_params(key, features, out_features, sizes):
    params = {"stages": []}
    for size in sizes:
        key, k1, k2, k3, k4, k5 = jax.random.split(key, 6)
        params["stages"].append(dict(
            size=size,
            conv_w=0.1 * jax.random.normal(k1, (out_features, features), jnp.float32),
            gamma=1.0 + 0.1 * jax.random.normal(k2, (out_features,), jnp.float32),
            beta=0.1 * jax.random.normal(k3, (out_features,), jnp.float32),
            mean=0.1 * jax.random.normal(k4, (out_features,), jnp.float32),
            var=jnp.abs(jax.random.normal(k5, (out_features,), jnp.float32)) + 0.5,
        ))
    cin = features + len(sizes) * out_features
    key, k1, k2, k3, k4, k5, k6 = jax.random.split(key, 7)
    params["bottleneck"] = dict(
        conv_w=0.05 * jax.random.normal(k1, (out_features, cin), jnp.float32),
        conv_b=0.05 * jax.random.normal(k2, (out_features,), jnp.float32),
        gamma=1.0 + 0.1 * jax.random.normal(k3, (out_features,), jnp.float32),
        beta=0.1 * jax.random.normal(k4, (out_features,), jnp.float32),
        mean=0.1 * jax.random.normal(k5, (out_features,), jnp.float32),
        var=jnp.abs(jax.random.normal(k6, (out_features,), jnp.float32)) + 0.5,
    )
    return params


# ----------------------------------------------------------------------------
# Forward pass
# ----------------------------------------------------------------------------
def psp_module_v2_forward(x_nchw, params, out_dtype=jnp.bfloat16):
    # out_dtype=jnp.float32 gives exact f32 writeback if the consumer needs it.
    N, C, H, W = x_nchw.shape
    sizes = [st["size"] for st in params["stages"]]

    bt = params["bottleneck"]
    O = bt["conv_w"].shape[0]
    scale_bt = bt["gamma"] / jnp.sqrt(bt["var"] + BN_EPS)
    w_bt_eff = bt["conv_w"] * scale_bt[:, None]                 # (O, C_tot), BN folded
    b_bt_eff = scale_bt * (bt["conv_b"] - bt["mean"]) + bt["beta"]

    # Pyramid branch (tiny: <= 50 pooled pixels per image) -> plain XLA.
    # pool -> 1x1 conv (BN folded) -> leaky_relu -> this stage's bottleneck weight
    # slice at pooled resolution (1x1 conv commutes with bilinear upsampling).
    z_blocks = []
    ch_off = 0
    for st in params["stages"]:
        s = st["size"]
        Os = st["conv_w"].shape[0]
        Ph = jnp.asarray(adaptive_avg_pool_matrix(H, s))        # (s, H)
        Pw = jnp.asarray(adaptive_avg_pool_matrix(W, s))        # (s, W)
        pooled = jnp.einsum('nchw,ph,qw->npqc', x_nchw, Ph, Pw).reshape(N, s * s, C)
        scale = st["gamma"] / jnp.sqrt(st["var"] + BN_EPS)
        w_eff = st["conv_w"].T * scale[None, :]                 # (C, O_stage)
        b_eff = st["beta"] - scale * st["mean"]                 # (O_stage,)
        y = pooled @ w_eff + b_eff
        y = jnp.where(y >= 0.0, y, LEAKY_SLOPE * y)             # (N, s*s, O_stage)
        wi = w_bt_eff[:, ch_off:ch_off + Os]                    # (O, O_stage)
        z_blocks.append(jnp.einsum('npc,oc->nop', y, wi))       # (N, O, s*s)
        ch_off += Os
    Z = jnp.concatenate(z_blocks, axis=-1)                      # (N, O, S)
    S = Z.shape[-1]

    wx_eff = w_bt_eff[:, ch_off:]                               # (O, C) feats slice

    # Fused per-image LHS: [Z | b_eff | 0 | wx_eff]  (tiny; bf16 at the boundary)
    SP = _round_up(S + 1, 16)                                   # align x rows to bf16 sublanes
    w_full = jnp.concatenate([
        Z,
        jnp.broadcast_to(b_bt_eff[None, :, None], (N, O, 1)),
        jnp.zeros((N, O, SP - S - 1), jnp.float32),
        jnp.broadcast_to(wx_eff[None], (N, O, C)),
    ], axis=-1).astype(jnp.bfloat16)                            # (N, O, SP + C)

    # RHS prefix: stacked upsample rows + ones bias row + zero pad rows (bf16)
    u_np = stacked_upsample_matrix(sizes, H, W)                 # (S, H*W)
    u_np = np.concatenate([u_np,
                           np.ones((1, H * W), np.float32),
                           np.zeros((SP - S - 1, H * W), np.float32)], axis=0)
    u_aug = jnp.asarray(u_np, dtype=jnp.bfloat16)               # (SP, H*W)

    x_cm = x_nchw.reshape(N, C, H * W)                          # channels-first; free reshape
    out = psp_bottleneck_fused(x_cm, w_full, u_aug, out_dtype=out_dtype)
    # TODO(synk): Dropout2d(p=0.1) is identity at inference; no stochastic drop here.
    return out.reshape(N, O, H, W)


# ----------------------------------------------------------------------------
# Pure-JAX f32 reference (tolerance check before trusting the bf16 kernel)
# ----------------------------------------------------------------------------
def psp_module_v2_reference(x, params):
    N, C, H, W = x.shape
    priors = []
    for st in params["stages"]:
        s = st["size"]
        Ph = jnp.asarray(adaptive_avg_pool_matrix(H, s))
        Pw = jnp.asarray(adaptive_avg_pool_matrix(W, s))
        pooled = jnp.einsum('nchw,ph,qw->ncpq', x, Ph, Pw)
        y = jnp.einsum('ncpq,oc->nopq', pooled, st["conv_w"])
        scale = st["gamma"] / jnp.sqrt(st["var"] + BN_EPS)
        y = y * scale[None, :, None, None] \
            + (st["beta"] - scale * st["mean"])[None, :, None, None]
        y = jnp.where(y >= 0.0, y, LEAKY_SLOPE * y)
        Bh = jnp.asarray(bilinear_upsample_matrix(s, H))
        Bw = jnp.asarray(bilinear_upsample_matrix(s, W))
        priors.append(jnp.einsum('nopq,hp,wq->nohw', y, Bh, Bw))
    priors.append(x)
    cat = jnp.concatenate(priors, axis=1)
    bt = params["bottleneck"]
    y = jnp.einsum('nchw,oc->nohw', cat, bt["conv_w"]) + bt["conv_b"][None, :, None, None]
    scale = bt["gamma"] / jnp.sqrt(bt["var"] + BN_EPS)
    y = scale[None, :, None, None] * (y - bt["mean"][None, :, None, None]) \
        + bt["beta"][None, :, None, None]
    return jnp.where(y >= 0.0, y, LEAKY_SLOPE * y)


if __name__ == "__main__":
    features, out_features, sizes = 4, 32, (1, 2, 3, 6)
    key = jax.random.PRNGKey(0)
    key, kx, kp = jax.random.split(key, 3)
    x = jax.random.normal(kx, (2, features, 16, 16), jnp.float32)  # NCHW
    params = init_params(kp, features, out_features, sizes)

    out = jax.block_until_ready(psp_module_v2_forward(x, params))
    assert out.shape == (2, out_features, 16, 16)
    assert bool(jnp.all(jnp.isfinite(out)))

    # Tolerance-asserted pure-JAX f32 reference (bf16 kernel path, f32 accumulation).
    ref = jax.block_until_ready(psp_module_v2_reference(x, params))
    err = float(jnp.max(jnp.abs(out.astype(jnp.float32) - ref)))
    bound = 5e-2 * (float(jnp.max(jnp.abs(ref))) + 1.0)
    assert err <= bound, f"kernel/reference mismatch: max_abs_err={err} > {bound}"
    print("KERNEL_OK")
</pallas_src>

<mosaic_0001>
module attributes {stable_mosaic.version = 11 : i64} {
  func.func @_psp_bottleneck_kernel(%arg0: i32, %arg1: i32, %arg2: memref<64x256xbf16, #tpu.memory_space<vmem>>, %arg3: memref<1x4x256xf32, #tpu.memory_space<vmem>>, %arg4: memref<1x32x68xbf16, #tpu.memory_space<vmem>>, %arg5: memref<1x32x256xbf16, #tpu.memory_space<vmem>>, %arg6: memref<68x256xbf16, #tpu.memory_space<vmem>>) attributes {dimension_semantics = [#tpu.dimension_semantics<parallel>, #tpu.dimension_semantics<parallel>], iteration_bounds = array<i64: 2, 1>, scalar_prefetch = 0 : i64, scratch_operands = 1 : i64, tpu.core_type = #tpu.core_type<tc>, window_params = [{transform_indices = @transform_0, window_bounds = array<i64: 64, 256>}, {transform_indices = @transform_1, window_bounds = array<i64: 1, 4, 256>}, {transform_indices = @transform_2, window_bounds = array<i64: 1, 32, 68>}, {transform_indices = @transform_3, window_bounds = array<i64: 1, 32, 256>}]} {
    %c0 = arith.constant 0 : index
    %c0_0 = arith.constant 0 : index
    %0 = vector.load %arg2[%c0, %c0_0] : memref<64x256xbf16, #tpu.memory_space<vmem>>, vector<64x256xbf16>
    %c0_1 = arith.constant 0 : index
    %c0_2 = arith.constant 0 : index
    %1 = vector.load %arg6[%c0_1, %c0_2] : memref<68x256xbf16, #tpu.memory_space<vmem>>, vector<64x256xbf16>
    tpu.vector_store %arg6[%c0_1, %c0_2], %0 {strides = array<i32>} : memref<68x256xbf16, #tpu.memory_space<vmem>>, vector<64x256xbf16>,
    %c0_3 = arith.constant 0 : index
    %c0_4 = arith.constant 0 : index
    %c0_5 = arith.constant 0 : index
    %2 = vector.load %arg3[%c0_3, %c0_4, %c0_5] : memref<1x4x256xf32, #tpu.memory_space<vmem>>, vector<1x4x256xf32>
    %3 = vector.shape_cast %2 : vector<1x4x256xf32> to vector<4x256xf32>
    %4 = arith.truncf %3 : vector<4x256xf32> to vector<4x256xbf16>
    %c64 = arith.constant 64 : index
    %c0_6 = arith.constant 0 : index
    %5 = vector.load %arg6[%c64, %c0_6] : memref<68x256xbf16, #tpu.memory_space<vmem>>, vector<4x256xbf16>
    tpu.vector_store %arg6[%c64, %c0_6], %4 {strides = array<i32>} : memref<68x256xbf16, #tpu.memory_space<vmem>>, vector<4x256xbf16>,
    %c0_7 = arith.constant 0 : index
    %c0_8 = arith.constant 0 : index
    %c0_9 = arith.constant 0 : index
    %6 = vector.load %arg4[%c0_7, %c0_8, %c0_9] : memref<1x32x68xbf16, #tpu.memory_space<vmem>>, vector<1x32x68xbf16>
    %7 = vector.shape_cast %6 : vector<1x32x68xbf16> to vector<32x68xbf16>
    %c0_10 = arith.constant 0 : index
    %c0_11 = arith.constant 0 : index
    %8 = vector.load %arg6[%c0_10, %c0_11] : memref<68x256xbf16, #tpu.memory_space<vmem>>, vector<68x256xbf16>
    %cst = arith.constant dense<0.000000e+00> : vector<32x256xf32>
    %9 = tpu.matmul %7, %8, %cst {dimension_numbers = #tpu.dot_dimension_numbers<[1], [0], [0], [1], [0, 0, 1, 1], [], []>} : vector<32x68xbf16>, vector<68x256xbf16>, vector<32x256xf32> -> vector<32x256xf32>
    %cst_12 = arith.constant 0.000000e+00 : f32
    %10 = vector.broadcast %cst_12 : f32 to vector<32x256xf32>
    %11 = arith.cmpf oge, %9, %10 : vector<32x256xf32>
    %cst_13 = arith.constant 0.00999999977 : f32
    %12 = vector.broadcast %cst_13 : f32 to vector<32x256xf32>
    %13 = arith.mulf %12, %9 : vector<32x256xf32>
    %14 = arith.select %11, %9, %13 : vector<32x256xi1>, vector<32x256xf32>
    %15 = arith.truncf %14 : vector<32x256xf32> to vector<32x256xbf16>
    %c0_14 = arith.constant 0 : index
    %c0_15 = arith.constant 0 : index
    %c0_16 = arith.constant 0 : index
    %16 = vector.load %arg5[%c0_14, %c0_15, %c0_16] : memref<1x32x256xbf16, #tpu.memory_space<vmem>>, vector<1x32x256xbf16>
    %17 = vector.shape_cast %16 : vector<1x32x256xbf16> to vector<32x256xbf16>
    %18 = vector.shape_cast %15 : vector<32x256xbf16> to vector<1x32x256xbf16>
    tpu.vector_store %arg5[%c0_14, %c0_15, %c0_16], %18 {strides = array<i32>} : memref<1x32x256xbf16, #tpu.memory_space<vmem>>, vector<1x32x256xbf16>,
    return
  }
  func.func @transform_0(%arg0: i32, %arg1: i32) -> (i32, i32) {
    %c0_i32 = arith.constant 0 : i32
    %c0_i32_0 = arith.constant 0 : i32
    return %c0_i32, %arg1 : i32, i32
  }
  func.func @transform_1(%arg0: i32, %arg1: i32) -> (i32, i32, i32) {
    %c0_i32 = arith.constant 0 : i32
    %c0_i32_0 = arith.constant 0 : i32
    return %arg0, %c0_i32, %arg1 : i32, i32, i32
  }
  func.func @transform_2(%arg0: i32, %arg1: i32) -> (i32, i32, i32) {
    %c0_i32 = arith.constant 0 : i32
    %c0_i32_0 = arith.constant 0 : i32
    %c0_i32_1 = arith.constant 0 : i32
    return %arg0, %c0_i32, %c0_i32_0 : i32, i32, i32
  }
  func.func @transform_3(%arg0: i32, %arg1: i32) -> (i32, i32, i32) {
    %c0_i32 = arith.constant 0 : i32
    %c0_i32_0 = arith.constant 0 : i32
    return %arg0, %c0_i32, %arg1 : i32, i32, i32
  }
}

</mosaic_0001>

<llo_original>
// kernel: tpu_custom_call.1
$region0: #{tpu_custom_call.1}
  #allocation0 [shape = 'u32[]', space=smem, size = 0x4, offset = 0x4, fixed_abs, tag = 'smem constant byte address 0x4 - core index']
  #allocation1 [shape = 'u32[144,128]{1,0:T(1,128)}', space=vmem, size = 0x12000, scoped, tag = 'internal scratch']
  #allocation2 [shape = 'bf16[68,256]{1,0:T(8,128)(2,1)}', space=vmem, size = 0x9000, scoped, tag = 'scratch operand']
  %s0 = inlined_call_operand.hbm [shape: bf16[64,256], index: 0, kind: input, shape index: {}]
  %s1 = inlined_call_operand.hbm [shape: f32[2,4,256], index: 1, kind: input, shape index: {}]
  %s2 = inlined_call_operand.hbm [shape: bf16[2,32,68], index: 2, kind: input, shape index: {}]
  %s3 = inlined_call_operand.hbm [shape: bf16[2,32,256], index: 3, kind: output, shape index: {}]
  %s4 = sld [smem:[#allocation0]]
  $region57: #{tpu_custom_call.1} parent=0
    _
  %s6 = ssub.s32 1, %s4
  %s7 = scalar_select 0, %s6, %s4
  $region1: #{tpu_custom_call.1} parent=0
    #allocation3 [shape = 'u8[32768]{0}', space=vmem, size = 0x8000, scoped, tag = 'input window, operand 0, single buffered']
    #allocation4 [shape = 's32[2]{0}', space=sflag, size = 0x8, scoped, tag = 'scoped memory for tpu_custom_call.1']
    #allocation5 [shape = 's32[2]{0}', space=sflag, size = 0x8, scoped, tag = 'scoped memory for tpu_custom_call.1']
    #allocation6 [shape = 'u8[8192]{0}', space=vmem, size = 0x2000, scoped, tag = 'input window, operand 1']
    #allocation7 [shape = 's32[2]{0}', space=sflag, size = 0x8, scoped, tag = 'scoped memory for tpu_custom_call.1']
    #allocation8 [shape = 'u8[16384]{0}', space=vmem, size = 0x4000, scoped, tag = 'input window, operand 2']
    #allocation9 [shape = 'u8[32768]{0}', space=vmem, size = 0x8000, scoped, tag = 'output window, operand 0']
    %8 = vsyncpa [#allocation4], 0
    %9 = vsyncpa [#allocation7], 0
    %s10 = scalar_lea.sflag [#allocation7], 1
    %11 = vsyncpa %s10, 0
    %12 = vsyncpa [#allocation5], 0
    %s13 = scalar_lea.sflag [#allocation5], 1
    %14 = vsyncpa %s13, 0
    loop: start=0, step=1, limit=4
    $region2: #{tpu_custom_call.1} parent=1 // loop_pre_header
      _
    $region3: #{tpu_custom_call.1} parent=1 // loop_header
      %s16 = sphi 0, %s20
      %p17 = scmp.ge.s32.totalorder %s16, 4
      %s23 = sphi 0, %s35
      %s24 = sphi 0, %s31
      %s25 = sphi 0, %s23
      %s26 = sphi 0, %s24
      %s27 = sphi 0, %s25
      %s28 = sphi 0, %s26
      %s38 = sphi 0, %s40
      %s41 = sphi 0, %s38
      %s42 = sphi 0, %s41
      %s58 = sphi 0, %s42
      %s66 = sphi 0, %s68
      %s69 = sphi 0, %s66
      %s70 = sphi 0, %s69
      %s86 = sphi 0, %s70
      %s92 = sphi 0, %s94
      %s95 = sphi 0, %s92
      %s96 = sphi 0, %s95
      %s112 = sphi 0, %s96
      %s120 = sphi 0, %s122
      %s123 = sphi 0, %s120
      %s124 = sphi 0, %s123
      %s140 = sphi 0, %s124
    $region4: #{tpu_custom_call.1} parent=1 // loop_header_branch
      %19 = sbr.rel (%p17) target = $region8
    $region5: #{tpu_custom_call.1} parent=1 // loop_body
      %s21 = ssub.s32 %s16, 1
      %s22 = ssub.s32 %s16, 2
      %s29 = sadd.s32 1, %s24
      %p30 = scmp.ge.s32.totalorder %s29, 1
      %s31 = scalar_select %p30, 0, %s29
      %s32 = sadd.s32 1, %s23
      %s33 = scalar_select %p30, %s32, %s23
      %p34 = scmp.ge.s32.totalorder %s33, 2
      %s35 = scalar_select %p34, 0, %s33
      %s36 = ssub.s32 %s24, %s31
      %p37 = scmp.eq.s32.totalorder %s36, 0
      %s39 = sadd.s32 %s38, 1
      %s40 = scalar_select %p37, %s38, %s39
      %p43 = pneg %p37
      %p44 = scmp.eq.s32.totalorder %s16, 1
      %p45 = por %p43, %p44
      %p46 = scmp.ne.s32.totalorder %s38, %s41
      %p47 = scmp.eq.s32.totalorder %s16, 0
      %p48 = por %p46, %p47
      %p49 = scmp.ne.s32.totalorder %s38, %s41
      %p50 = scmp.eq.s32.totalorder %s21, 1
      %p51 = por %p49, %p50
      %p52 = scmp.ne.s32.totalorder %s41, %s42
      %p53 = scmp.eq.s32.totalorder %s21, 0
      %p54 = por %p52, %p53
      %p55 = scmp.ne.s32.totalorder %s41, %s42
      %p56 = scmp.eq.s32.totalorder %s22, 1
      %p57 = por %p55, %p56
      %p59 = scmp.ne.s32.totalorder %s42, %s58
      %p60 = scmp.eq.s32.totalorder %s22, 0
      %p61 = por %p59, %p60
      %s62 = ssub.s32 %s23, %s35
      %s63 = ssub.s32 %s24, %s31
      %s64 = sor.u32 %s62, %s63
      %p65 = scmp.eq.s32.totalorder %s64, 0
      %s67 = sadd.s32 %s66, 1
      %s68 = scalar_select %p65, %s66, %s67
      %p71 = pneg %p65
      %p72 = scmp.eq.s32.totalorder %s16, 1
      %p73 = por %p71, %p72
      %p74 = scmp.ne.s32.totalorder %s66, %s69
      %p75 = scmp.eq.s32.totalorder %s16, 0
      %p76 = por %p74, %p75
      %p77 = scmp.ne.s32.totalorder %s66, %s69
      %p78 = scmp.eq.s32.totalorder %s21, 1
      %p79 = por %p77, %p78
      %p80 = scmp.ne.s32.totalorder %s69, %s70
      %p81 = scmp.eq.s32.totalorder %s21, 0
      %p82 = por %p80, %p81
      %p83 = scmp.ne.s32.totalorder %s69, %s70
      %p84 = scmp.eq.s32.totalorder %s22, 1
      %p85 = por %p83, %p84
      %p87 = scmp.ne.s32.totalorder %s70, %s86
      %p88 = scmp.eq.s32.totalorder %s22, 0
      %p89 = por %p87, %p88
      %s90 = ssub.s32 %s23, %s35
      %p91 = scmp.eq.s32.totalorder %s90, 0
      %s93 = sadd.s32 %s92, 1
      %s94 = scalar_select %p91, %s92, %s93
      %p97 = pneg %p91
      %p98 = scmp.eq.s32.totalorder %s16, 1
      %p99 = por %p97, %p98
      %p100 = scmp.ne.s32.totalorder %s92, %s95
      %p101 = scmp.eq.s32.totalorder %s16, 0
      %p102 = por %p100, %p101
      %p103 = scmp.ne.s32.totalorder %s92, %s95
      %p104 = scmp.eq.s32.totalorder %s21, 1
      %p105 = por %p103, %p104
      %p106 = scmp.ne.s32.totalorder %s95, %s96
      %p107 = scmp.eq.s32.totalorder %s21, 0
      %p108 = por %p106, %p107
      %p109 = scmp.ne.s32.totalorder %s95, %s96
      %p110 = scmp.eq.s32.totalorder %s22, 1
      %p111 = por %p109, %p110
      %p113 = scmp.ne.s32.totalorder %s96, %s112
      %p114 = scmp.eq.s32.totalorder %s22, 0
      %p115 = por %p113, %p114
      %s116 = ssub.s32 %s23, %s35
      %s117 = ssub.s32 %s24, %s31
      %s118 = sor.u32 %s116, %s117
      %p119 = scmp.eq.s32.totalorder %s118, 0
      %s121 = sadd.s32 %s120, 1
      %s122 = scalar_select %p119, %s120, %s121
      %p125 = pneg %p119
      %p126 = scmp.eq.s32.totalorder %s16, 1
      %p127 = por %p125, %p126
      %p128 = scmp.ne.s32.totalorder %s120, %s123
      %p129 = scmp.eq.s32.totalorder %s16, 0
      %p130 = por %p128, %p129
      %p131 = scmp.ne.s32.totalorder %s120, %s123
      %p132 = scmp.eq.s32.totalorder %s21, 1
      %p133 = por %p131, %p132
      %p134 = scmp.ne.s32.totalorder %s123, %s124
      %p135 = scmp.eq.s32.totalorder %s21, 0
      %p136 = por %p134, %p135
      %p137 = scmp.ne.s32.totalorder %s123, %s124
      %p138 = scmp.eq.s32.totalorder %s22, 1
      %p139 = por %p137, %p138
      %p141 = scmp.ne.s32.totalorder %s124, %s140
      %p142 = scmp.eq.s32.totalorder %s22, 0
      %p143 = por %p141, %p142
      %p144 = scmp.le.s32.totalorder 1, %s16
      %p145 = scmp.lt.s32.totalorder %s16, 3
      %p146 = pnand %p144, %p145
      %p147 = pneg %p146
      // Predicated region
      $region9: #{tpu_custom_call.1} parent=5 // pred_check
        _
      $region10: #{tpu_custom_call.1} parent=5 // pred_check_branch
        %149 = sbr.rel (%p146) target = $region12
      $region11: #{tpu_custom_call.1} parent=5 // pred_region
        %s150 = ssub.s32 %s16, 1
        // Predicated region
        $region13: #{tpu_custom_call.1} parent=11 // pred_check
          %p151 = pneg %p54
        $region14: #{tpu_custom_call.1} parent=11 // pred_check_branch
          %153 = sbr.rel (%p151) target = $region16
        $region15: #{tpu_custom_call.1} parent=11 // pred_region
          %s154 = smul.u32 2, %s26
          %s156 = ssub.s32 1024, 1024
          %157 = vsyncadd [#allocation4], %s156
          %s158 = smul.addr %s154, 64
          %s159 = scalar_lea.hbm %s0, %s158
          %s160 = sshll.u32 [#allocation3], 4
          %s161 = int_to_ptr.vmem [resolvable:$true] %s160
          %166 = dma.hbm_to_vmem [thread:$0]  %s159, 1024, %s161, [#allocation4], 128, 128, 8
        $region16: #{tpu_custom_call.1} parent=11 // pred_fallthru
          _
      $region12: #{tpu_custom_call.1} parent=5 // pred_fallthru
        _
      %p167 = scmp.lt.s32.totalorder %s16, 2
      // Predicated region
      $region17: #{tpu_custom_call.1} parent=5 // pred_check
        %p168 = pneg %p167
      $region18: #{tpu_custom_call.1} parent=5 // pred_check_branch
        %170 = sbr.rel (%p168) target = $region20
      $region19: #{tpu_custom_call.1} parent=5 // pred_region
        // Predicated region
        $region21: #{tpu_custom_call.1} parent=19 // pred_check
          %p171 = pneg %p76
        $region22: #{tpu_custom_call.1} parent=19 // pred_check_branch
          %173 = sbr.rel (%p171) target = $region24
        $region23: #{tpu_custom_call.1} parent=19 // pred_region
          %s174 = sand.u32 %s16, 1
          %s175 = scalar_lea.sflag [#allocation7], %s174
          %s176 = sand.u32 %s66, 1
          %s177 = smul.addr %s176, 8
          %s178 = scalar_lea.vmem [#allocation6], %s177
          %s179 = smul.u32 2, %s24
          %s181 = ssub.s32 128, 128
          %182 = vsyncadd %s175, %s181
          %s183 = smul.addr %s23, 2
          %s184 = sadd.s32 %s179, %s183
          %s185 = smul.addr %s184, 64
          %s186 = scalar_lea.hbm %s1, %s185
          %s188 = sshll.u32 %s178, 4
          %s189 = int_to_ptr.vmem [resolvable:$true] %s188
          %191 = dma.hbm_to_vmem [thread:$0]  %s186, 128, %s189, %s175
        $region24: #{tpu_custom_call.1} parent=19 // pred_fallthru
          _
        // Predicated region
        $region25: #{tpu_custom_call.1} parent=19 // pred_check
          %p192 = pneg %p102
        $region26: #{tpu_custom_call.1} parent=19 // pred_check_branch
          %194 = sbr.rel (%p192) target = $region28
        $region27: #{tpu_custom_call.1} parent=19 // pred_region
          %s195 = sand.u32 %s16, 1
          %s196 = scalar_lea.sflag [#allocation7], %s195
          %s197 = sand.u32 %s92, 1
          %s198 = smul.addr %s197, 16
          %s199 = scalar_lea.vmem [#allocation8], %s198
          %s201 = ssub.s32 256, 256
          %202 = vsyncadd %s196, %s201
          %s203 = smul.addr %s23, 4
          %s204 = smul.addr %s203, 64
          %s205 = scalar_lea.hbm %s2, %s204
          %s206 = sshll.u32 %s199, 4
          %s207 = int_to_ptr.vmem [resolvable:$true] %s206
          %212 = dma.hbm_to_vmem [thread:$0]  %s205, 256, %s207, %s196, 64, 64, 4
        $region28: #{tpu_custom_call.1} parent=19 // pred_fallthru
          _
      $region20: #{tpu_custom_call.1} parent=5 // pred_fallthru
        _
      %p213 = scmp.le.s32.totalorder 1, %s16
      %p214 = scmp.lt.s32.totalorder %s16, 3
      %p215 = pnand %p213, %p214
      %p216 = pneg %p215
      // Predicated region
      $region29: #{tpu_custom_call.1} parent=5 // pred_check
        _
      $region30: #{tpu_custom_call.1} parent=5 // pred_check_branch
        %218 = sbr.rel (%p215) target = $region32
      $region31: #{tpu_custom_call.1} parent=5 // pred_region
        %s219 = ssub.s32 %s16, 1
        // Predicated region
        $region33: #{tpu_custom_call.1} parent=31 // pred_check
          %p220 = pneg %p54
        $region34: #{tpu_custom_call.1} parent=31 // pred_check_branch
          %222 = sbr.rel (%p220) target = $region36
        $region35: #{tpu_custom_call.1} parent=31 // pred_region
          %223 = dma.done [#allocation4], 1024
        $region36: #{tpu_custom_call.1} parent=31 // pred_fallthru
          _
        %s224 = sand.u32 %s21, 1
        %s225 = scalar_lea.sflag [#allocation7], %s224
        %s226 = sand.u32 %s69, 1
        %s227 = smul.addr %s226, 8
        %s228 = scalar_lea.vmem [#allocation6], %s227
        // Predicated region
        $region37: #{tpu_custom_call.1} parent=31 // pred_check
          %p229 = pneg %p82
        $region38: #{tpu_custom_call.1} parent=31 // pred_check_branch
          %231 = sbr.rel (%p229) target = $region40
        $region39: #{tpu_custom_call.1} parent=31 // pred_region
          %232 = dma.done %s225, 128
        $region40: #{tpu_custom_call.1} parent=31 // pred_fallthru
          _
        %s233 = sand.u32 %s21, 1
        %s234 = scalar_lea.sflag [#allocation7], %s233
        %s235 = sand.u32 %s95, 1
        %s236 = smul.addr %s235, 16
        %s237 = scalar_lea.vmem [#allocation8], %s236
        // Predicated region
        $region41: #{tpu_custom_call.1} parent=31 // pred_check
          %p238 = pneg %p108
        $region42: #{tpu_custom_call.1} parent=31 // pred_check_branch
          %240 = sbr.rel (%p238) target = $region44
        $region43: #{tpu_custom_call.1} parent=31 // pred_region
          %241 = dma.done %s234, 256
        $region44: #{tpu_custom_call.1} parent=31 // pred_fallthru
          _
        %p242 = pneg %p54
        %p243 = pneg %p51
        %s244 = sand.u32 %s21, 1
        %s245 = scalar_lea.sflag [#allocation7], %s244
        %s246 = sand.u32 %s69, 1
        %s247 = smul.addr %s246, 8
        %s248 = scalar_lea.vmem [#allocation6], %s247
        %p249 = pneg %p82
        %p250 = pneg %p79
        %s251 = sand.u32 %s21, 1
        %s252 = scalar_lea.sflag [#allocation7], %s251
        %s253 = sand.u32 %s95, 1
        %s254 = smul.addr %s253, 16
        %s255 = scalar_lea.vmem [#allocation8], %s254
        %p256 = pneg %p108
        %p257 = pneg %p105
        %p258 = pneg %p136
        %p259 = pneg %p133
        %s260 = sand.u32 %s123, 1
        %s261 = scalar_lea.sflag [#allocation5], %s260
        %s262 = sand.u32 %s123, 1
        %s263 = smul.addr %s262, 32
        %s264 = scalar_lea.vmem [#allocation9], %s263
        %s265 = smul.u32 2, %s26
        %s266 = smul.u32 2, %s26
        %s267 = smul.u32 2, %s26
        %v269 = vld [vmem:[#allocation3] sm:$0xff]
        %v270 = vld [vmem:[#allocation3 + $0x8] sm:$0xff]
        %v271 = vld [vmem:[#allocation3 + $0x10] sm:$0xff]
        %v272 = vld [vmem:[#allocation3 + $0x18] sm:$0xff]
        %v273 = vld [vmem:[#allocation3 + $0x20] sm:$0xff]
        %v274 = vld [vmem:[#allocation3 + $0x28] sm:$0xff]
        %v275 = vld [vmem:[#allocation3 + $0x30] sm:$0xff]
        %v276 = vld [vmem:[#allocation3 + $0x38] sm:$0xff]
        %277 = vst [vmem:[#allocation2] sm:$0xff] %v269
        %278 = vst [vmem:[#allocation2 + $0x8] sm:$0xff] %v270
        %279 = vst [vmem:[#allocation2 + $0x10] sm:$0xff] %v271
        %280 = vst [vmem:[#allocation2 + $0x18] sm:$0xff] %v272
        %281 = vst [vmem:[#allocation2 + $0x20] sm:$0xff] %v273
        %282 = vst [vmem:[#allocation2 + $0x28] sm:$0xff] %v274
        %283 = vst [vmem:[#allocation2 + $0x30] sm:$0xff] %v275
        %284 = vst [vmem:[#allocation2 + $0x38] sm:$0xff] %v276
        %v285 = vld [vmem:[%s228] sm:$0xff]
        %v287 = vcombine.high %v285, %v285
        %v289 = vpack.c.bf16 %v285, %v285
        %v290 = vpack.c.bf16 %v287, %v287
        %v293 = vunpack.c.l.b16 %v289
        %v294 = vunpack.c.l.b16 %v290
        %v295 = vpack.c.b16 %v294, %v293
        %297 = vst [vmem:[#allocation2 + $0x40] sm:$0x33] %v295
        %v298 = vld [vmem:[%s237] sm:$0xf]
        %v299 = vld [vmem:[%s237 + $0x4] sm:$0xf]
        %v300 = vld [vmem:[%s237 + $0x8] sm:$0xf]
        %v301 = vld [vmem:[%s237 + $0xc] sm:$0xf]
        %v302 = vld [vmem:[#allocation2] sm:$0xff]
        %v303 = vld [vmem:[#allocation2 + $0x8] sm:$0xff]
        %v304 = vld [vmem:[#allocation2 + $0x10] sm:$0xff]
        %v305 = vld [vmem:[#allocation2 + $0x18] sm:$0xff]
        %v306 = vld [vmem:[#allocation2 + $0x20] sm:$0xff]
        %v307 = vld [vmem:[#allocation2 + $0x28] sm:$0xff]
        %v308 = vld [vmem:[#allocation2 + $0x30] sm:$0xff]
        %v309 = vld [vmem:[#allocation2 + $0x38] sm:$0xff]
        %v310 = vld [vmem:[#allocation2 + $0x40] sm:$0x33]
        %v315 = vunpack.c.l.b16 %v298
        %v316 = vunpack.c.l.b16 %v299
        %v317 = vunpack.c.l.b16 %v300
        %v318 = vunpack.c.l.b16 %v301
        %v319 = vpack.c.b16 %v316, %v315
        %v320 = vpack.c.b16 %v318, %v317
        %v330 = vunpack.c.l.b16 %v302
        %v331 = vunpack.c.h.b16 %v302
        %v332 = vunpack.c.l.b16 %v303
        %v333 = vunpack.c.h.b16 %v303
        %v334 = vunpack.c.l.b16 %v304
        %v335 = vunpack.c.h.b16 %v304
        %v336 = vunpack.c.l.b16 %v305
        %v337 = vunpack.c.h.b16 %v305
        %v338 = vunpack.c.l.b16 %v306
        %v339 = vunpack.c.h.b16 %v306
        %v340 = vunpack.c.l.b16 %v307
        %v341 = vunpack.c.h.b16 %v307
        %v342 = vunpack.c.l.b16 %v308
        %v343 = vunpack.c.h.b16 %v308
        %v344 = vunpack.c.l.b16 %v309
        %v345 = vunpack.c.h.b16 %v309
        %v346 = vunpack.c.l.b16 %v310
        %v347 = vunpack.c.h.b16 %v310
        %v348 = vpack.c.b16 %v332, %v330
        %v349 = vpack.c.b16 %v333, %v331
        %v350 = vpack.c.b16 %v336, %v334
        %v351 = vpack.c.b16 %v337, %v335
        %v352 = vpack.c.b16 %v340, %v338
        %v353 = vpack.c.b16 %v341, %v339
        %v354 = vpack.c.b16 %v344, %v342
        %v355 = vpack.c.b16 %v345, %v343
        %v356 = vpack.c.b16 %v346, %v346
        %v357 = vpack.c.b16 %v347, %v347
        %vm366 = vcmask 556032
        %v368 = vsel %vm366, %v319, 0
        %v371 = vsel %vm366, %v320, 0
        %vm373 = vcmask 1041408
        %v375 = vsel %vm373, %v356, 0
        %v378 = vsel %vm373, %v357, 0
        %380 = vmatprep.subr.bf16.mxu0 0
        %381 = vmatpush1.bf16.msra.mxu0 0
        %382 = vmatprep.subr.bf16.mxu0 0
        %383 = vmatpush1.bf16.msra.mxu0 0
        %384 = vmatprep.subr.bf16.mxu0 0
        %385 = vmatpush1.bf16.msra.mxu0 0
        %386 = vmatprep.subr.bf16.mxu0 %v378
        %387 = vmatpush1.bf16.msra.mxu0 %v375
        %388 = vmatprep.subr.bf16.mxu0 %v355
        %389 = vmatpush1.bf16.msra.mxu0 %v354
        %390 = vmatprep.subr.bf16.mxu0 %v353
        %391 = vmatpush1.bf16.msra.mxu0 %v352
        %392 = vmatprep.subr.bf16.mxu0 %v351
        %393 = vmatpush1.bf16.msra.mxu0 %v350
        %394 = vmatprep.subr.bf16.mxu0 %v349
        %395 = vmatpush1.bf16.msra.mxu0 %v348
        %396 = vmatprep.subr.bf16.mxu0 0
        %397 = vmatpush2.bf16.msra.mxu0 0
        %398 = vmatprep.subr.bf16.mxu0 0
        %399 = vmatpush2.bf16.msra.mxu0 0
        %400 = vmatprep.subr.bf16.mxu0 0
        %401 = vmatpush2.bf16.msra.mxu0 0
        %402 = vmatprep.subr.bf16.mxu0 0
        %403 = vmatpush2.bf16.msra.mxu0 0
        %404 = vmatprep.subr.bf16.mxu0 0
        %405 = vmatpush2.bf16.msra.mxu0 0
        %406 = vmatprep.subr.bf16.mxu0 0
        %407 = vmatpush2.bf16.msra.mxu0 0
        %408 = vmatprep.subr.bf16.mxu0 0
        %409 = vmatpush2.bf16.msra.mxu0 0
        %410 = vmatprep.subr.bf16.mxu0 0
        %411 = vmatpush2.bf16.msra.mxu0 0
        %412 = vmatprep.mubr.bf16.mxu0 0
        %413 = vmatmul.mubr.bf16.gmra.mxu0 %v368
        %v414 = vpop.f32.mrf.mxu0
        %v415 = vadd.f32 0.0, %v414
        %v416 = vpop.f32.mrf.mxu0
        %v417 = vadd.f32 0.0, %v416
        %v418 = vpop.f32.mrf.mxu0
        %v419 = vadd.f32 0.0, %v418
        %v420 = vpop.f32.mrf.mxu0
        %v421 = vadd.f32 0.0, %v420
        %422 = vmatprep.mubr.bf16.mxu0 0
        %423 = vmatmul.mubr.bf16.gmra.mxu0 %v371
        %v424 = vpop.f32.mrf.mxu0
        %v425 = vadd.f32 0.0, %v424
        %v426 = vpop.f32.mrf.mxu0
        %v427 = vadd.f32 0.0, %v426
        %v428 = vpop.f32.mrf.mxu0
        %v429 = vadd.f32 0.0, %v428
        %v430 = vpop.f32.mrf.mxu0
        %v431 = vadd.f32 0.0, %v430
        %432 = vdwg.mxu0
        %vm433 = vcmp.ge.f32.partialorder %v415, 0.0
        %vm434 = vcmp.ge.f32.partialorder %v417, 0.0
        %vm435 = vcmp.ge.f32.partialorder %v419, 0.0
        %vm436 = vcmp.ge.f32.partialorder %v421, 0.0
        %vm437 = vcmp.ge.f32.partialorder %v425, 0.0
        %vm438 = vcmp.ge.f32.partialorder %v427, 0.0
        %vm439 = vcmp.ge.f32.partialorder %v429, 0.0
        %vm440 = vcmp.ge.f32.partialorder %v431, 0.0
        %v441 = vmul.f32 %v415, 0.01
        %v442 = vmul.f32 %v417, 0.01
        %v443 = vmul.f32 %v419, 0.01
        %v444 = vmul.f32 %v421, 0.01
        %v445 = vmul.f32 %v425, 0.01
        %v446 = vmul.f32 %v427, 0.01
        %v447 = vmul.f32 %v429, 0.01
        %v448 = vmul.f32 %v431, 0.01
        %v449 = vsel %vm433, %v415, %v441
        %v450 = vsel %vm434, %v417, %v442
        %v451 = vsel %vm435, %v419, %v443
        %v452 = vsel %vm436, %v421, %v444
        %v453 = vsel %vm437, %v425, %v445
        %v454 = vsel %vm438, %v427, %v446
        %v455 = vsel %vm439, %v429, %v447
        %v456 = vsel %vm440, %v431, %v448
        %v457 = vpack.c.bf16 %v451, %v449
        %v458 = vpack.c.bf16 %v452, %v450
        %v459 = vpack.c.bf16 %v455, %v453
        %v460 = vpack.c.bf16 %v456, %v454
        %v465 = vunpack.c.l.b16 %v457
        %v466 = vunpack.c.l.b16 %v458
        %v467 = vunpack.c.h.b16 %v457
        %v468 = vunpack.c.h.b16 %v458
        %v469 = vunpack.c.l.b16 %v459
        %v470 = vunpack.c.l.b16 %v460
        %v471 = vunpack.c.h.b16 %v459
        %v472 = vunpack.c.h.b16 %v460
        %v473 = vpack.c.b16 %v466, %v465
        %v474 = vpack.c.b16 %v468, %v467
        %v475 = vpack.c.b16 %v470, %v469
        %v476 = vpack.c.b16 %v472, %v471
        %481 = vst [vmem:[%s264] sm:$0xff] %v473
        %482 = vst [vmem:[%s264 + $0x8] sm:$0xff] %v474
        %483 = vst [vmem:[%s264 + $0x10] sm:$0xff] %v475
        %484 = vst [vmem:[%s264 + $0x18] sm:$0xff] %v476
        %s485 = sand.u32 %s123, 1
        %s486 = scalar_lea.sflag [#allocation5], %s485
        %s487 = sand.u32 %s123, 1
        %s488 = smul.addr %s487, 32
        %s489 = scalar_lea.vmem [#allocation9], %s488
        // Predicated region
        $region45: #{tpu_custom_call.1} parent=31 // pred_check
          %p490 = pneg %p133
        $region46: #{tpu_custom_call.1} parent=31 // pred_check_branch
          %492 = sbr.rel (%p490) target = $region48
        $region47: #{tpu_custom_call.1} parent=31 // pred_region
          %s493 = smul.u32 2, %s26
          %s495 = ssub.s32 512, 512
          %496 = vsyncadd %s486, %s495
          %s497 = smul.addr %s25, 8
          %s498 = sadd.s32 %s493, %s497
          %s499 = smul.addr %s498, 64
          %s500 = scalar_lea.hbm %s3, %s499
          %s501 = sshll.u32 %s489, 4
          %s502 = int_to_ptr.vmem [resolvable:$true] %s501
          %507 = dma.vmem_to_hbm [thread:$0]  %s502, 512, %s500, %s486, 128, 128, 8
        $region48: #{tpu_custom_call.1} parent=31 // pred_fallthru
          _
      $region32: #{tpu_custom_call.1} parent=5 // pred_fallthru
        _
      %p508 = scmp.le.s32.totalorder 2, %s16
      // Predicated region
      $region49: #{tpu_custom_call.1} parent=5 // pred_check
        %p509 = pneg %p508
      $region50: #{tpu_custom_call.1} parent=5 // pred_check_branch
        %511 = sbr.rel (%p509) target = $region52
      $region51: #{tpu_custom_call.1} parent=5 // pred_region
        %s512 = ssub.s32 %s16, 2
        // Predicated region
        $region53: #{tpu_custom_call.1} parent=51 // pred_check
          %p513 = pneg %p139
        $region54: #{tpu_custom_call.1} parent=51 // pred_check_branch
          %515 = sbr.rel (%p513) target = $region56
        $region55: #{tpu_custom_call.1} parent=51 // pred_region
          %s516 = sand.u32 %s124, 1
          %s517 = scalar_lea.sflag [#allocation5], %s516
          %s518 = sand.u32 %s124, 1
          %s519 = smul.addr %s518, 32
          %s520 = scalar_lea.vmem [#allocation9], %s519
          %521 = dma.done %s517, 512
        $region56: #{tpu_custom_call.1} parent=51 // pred_fallthru
          _
      $region52: #{tpu_custom_call.1} parent=5 // pred_fallthru
        _
    $region6: #{tpu_custom_call.1} parent=1 // loop_footer
      %s20 = sadd.s32 1, %s16
    $region7: #{tpu_custom_call.1} parent=1 // loop_footer_branch
      %15 = sbr.rel target = $region3
    $region8: #{tpu_custom_call.1} parent=1 // loop_exit
      _
    %522 = vsyncpa [#allocation4], 1
    %s523 = scalar_lea.sflag [#allocation4], 1
    %524 = vsyncpa %s523, 1
    %525 = vsyncpa [#allocation7], 1
    %s526 = scalar_lea.sflag [#allocation7], 1
    %527 = vsyncpa %s526, 1
    %528 = vsyncpa [#allocation5], 1
    %s529 = scalar_lea.sflag [#allocation5], 1
    %530 = vsyncpa %s529, 1

</llo_original>
